<compile_context>
chip_gen: v5e
topology: v5e:2x2
jax: 0.10.0
libtpu: 0.0.40
codegen_flags: <defaults>
</compile_context>

<pallas_src>
import functools

import jax
import jax.numpy as jnp
from jax.experimental import pallas as pl
from jax.experimental.pallas import tpu as pltpu


# Per-buffer streamed-input block target (bytes).  ~2 MiB is past the measured
# ~85% HBM-roofline point; double-buffered it fits every generation's scoped
# VMEM default with large headroom.
_TARGET_BLOCK_BYTES = 2 * 1024 * 1024


def _legal_tb(tb, batch):
    """Clamp the batch block so a (tb, 2*D) output block is always legal:
    the second-minor block dim must be a multiple of 8 or the full array dim."""
    tb = max(1, min(int(tb), batch))
    if tb == batch or tb % 8 == 0:
        return tb
    if tb > 8:
        return (tb // 8) * 8
    return batch if batch <= 8 else 8


def _choose_tiles(batch, n_rows, d_eff, itemsize, sub):
    """VMEM-budget / dtype-driven (TB, TN) selection."""
    bytes_per_row = d_eff * itemsize
    budget_rows = max(sub, _TARGET_BLOCK_BYTES // bytes_per_row)  # TB * TN rows
    tb = _legal_tb(budget_rows // max(n_rows, 1), batch)
    per_batch_rows = max(sub, budget_rows // tb)
    if n_rows <= per_batch_rows:
        tn = n_rows                          # full-extent N block (always legal)
    else:
        tn = (per_batch_rows // sub) * sub   # sublane-multiple N tile
    # v7x megacore: prefer >= 2 grid steps along the parallel batch axis when
    # that keeps per-step blocks large enough to amortize per-step overhead.
    if tb == batch and batch >= 16:
        half = _legal_tb((batch + 1) // 2, batch)
        if half < batch and half * tn * bytes_per_row >= (256 << 10):
            tb = half
    return tb, tn


def _max_mean_cat_kernel(t_ref, o_ref, sum_ref, max_ref, *,
                         n_rows, tn, fold, d_out, inv_n):
    n = pl.program_id(1)
    n_last = pl.num_programs(1) - 1

    @pl.when(n == 0)
    def _init():
        sum_ref[...] = jnp.zeros_like(sum_ref)
        max_ref[...] = jnp.full_like(max_ref, -jnp.inf)

    x = t_ref[...].astype(jnp.float32)                    # (TB, TN, D_eff)

    def _accumulate(masked):
        if masked:
            # Ragged final N tile: out-of-range rows get the reduction identities.
            row = jax.lax.broadcasted_iota(jnp.int32, x.shape, 1) + n * tn
            valid = row < n_rows
            x_sum = jnp.where(valid, x, 0.0)
            x_max = jnp.where(valid, x, -jnp.inf)
        else:
            x_sum = x
            x_max = x
        sum_ref[...] = sum_ref[...] + jnp.sum(x_sum, axis=1)           # (TB, D_eff)
        max_ref[...] = jnp.maximum(max_ref[...], jnp.max(x_max, axis=1))

    if n_rows % tn != 0:
        # Mask only on the last (ragged) tile; steady-state tiles stay mask-free.
        @pl.when(n != n_last)
        def _steady():
            _accumulate(False)

        @pl.when(n == n_last)
        def _ragged():
            _accumulate(True)
    else:
        _accumulate(False)

    @pl.when(n == n_last)
    def _finalize():
        s = sum_ref[...]                     # (TB, fold * d_out) f32
        m = max_ref[...]
        tot_s = s[:, :d_out]
        tot_m = m[:, :d_out]
        for j in range(1, fold):             # one-time k-way lane-fold combine
            tot_s = tot_s + s[:, j * d_out:(j + 1) * d_out]
            tot_m = jnp.maximum(tot_m, m[:, j * d_out:(j + 1) * d_out])
        mean = tot_s * inv_n
        o_ref[...] = jnp.concatenate(
            [mean.astype(o_ref.dtype), tot_m.astype(o_ref.dtype)], axis=-1)


def max_mean_cat_agg(token, *, tb=None, tn=None):
    """token: [B, N, D] -> [B, 2*D] = concat(mean over N, max over N)."""
    B, N, D = token.shape
    dtype = jnp.dtype(token.dtype)
    itemsize = dtype.itemsize
    sub = max(8, 32 // itemsize)        # sublane multiple: 8 f32, 16 bf16, 32 int8

    # Lane folding: with D < 128 only D/128 of each vreg's lanes carry data.
    # Reshape [B, N, D] -> [B, N/k, k*D] (contiguous => free) so streamed blocks
    # are lane-dense; the k partial results are combined once in the finalize.
    fold = 1
    if D < 128 and 128 % D == 0:
        fold = 128 // D
        while fold > 1 and N % fold != 0:
            fold //= 2
    n_rows = N // fold
    d_eff = fold * D
    tok = token.reshape(B, n_rows, d_eff) if fold > 1 else token

    auto_tb, auto_tn = _choose_tiles(B, n_rows, d_eff, itemsize, sub)
    tb = _legal_tb(auto_tb if tb is None else tb, B)
    tn = min(auto_tn if tn is None else tn, n_rows)
    n_tiles = pl.cdiv(n_rows, tn)

    # VMEM limit from the actual working set (double-buffered I/O + scratch),
    # capped so it is always safe on v7x's 64 MiB physical VMEM.
    in_block_bytes = tb * tn * d_eff * itemsize
    out_block_bytes = tb * 2 * D * itemsize
    scratch_bytes = 2 * tb * d_eff * 4
    working_set = 2 * in_block_bytes + 2 * out_block_bytes + scratch_bytes
    vmem_limit = int(min(max(2 * working_set, 16 << 20), 48 << 20))

    kernel = functools.partial(
        _max_mean_cat_kernel,
        n_rows=n_rows, tn=tn, fold=fold, d_out=D, inv_n=1.0 / N)

    out = pl.pallas_call(
        kernel,
        out_shape=jax.ShapeDtypeStruct((B, 2 * D), token.dtype),
        grid=(pl.cdiv(B, tb), n_tiles),
        in_specs=[
            pl.BlockSpec((tb, tn, d_eff), lambda b, n: (b, n, 0)),  # streamed tokens
        ],
        out_specs=pl.BlockSpec((tb, 2 * D), lambda b, n: (b, 0)),   # resident over N
        scratch_shapes=[
            pltpu.VMEM((tb, d_eff), jnp.float32),   # running sum
            pltpu.VMEM((tb, d_eff), jnp.float32),   # running max
        ],
        compiler_params=pltpu.CompilerParams(
            dimension_semantics=("parallel", "arbitrary"),
            vmem_limit_bytes=vmem_limit),
        cost_estimate=pl.CostEstimate(
            flops=2 * B * N * D,
            transcendentals=0,
            bytes_accessed=B * N * D * itemsize + B * 2 * D * itemsize),
    )(tok)
    return out


def max_mean_cat_reference(token):
    t = token.astype(jnp.float32)
    return jnp.concatenate([jnp.mean(t, axis=1), jnp.max(t, axis=1)],
                           axis=-1).astype(token.dtype)


def _check(out, ref, rtol, atol):
    out32 = out.astype(jnp.float32)
    ref32 = ref.astype(jnp.float32)
    assert out.shape == ref.shape, (out.shape, ref.shape)
    assert jnp.allclose(out32, ref32, rtol=rtol, atol=atol), (out32, ref32)


if __name__ == "__main__":
    keys = jax.random.split(jax.random.PRNGKey(0), 5)

    # 1) Auto tiling, lane-folded (D=32 -> fold=4), single N tile.
    tok = jax.random.normal(keys[0], (2, 16, 32), dtype=jnp.float32)
    out = jax.block_until_ready(max_mean_cat_agg(tok))
    _check(out, max_mean_cat_reference(tok), 1e-5, 1e-5)

    # 2) Lane-folded + multi-tile N with a ragged last tile (12 folded rows, tn=8).
    tok = jax.random.normal(keys[1], (2, 48, 32), dtype=jnp.float32)
    out = jax.block_until_ready(max_mean_cat_agg(tok, tn=8))
    _check(out, max_mean_cat_reference(tok), 1e-5, 1e-5)

    # 3) Unfoldable N (N=13), ragged last tile, full-batch block.
    tok = jax.random.normal(keys[2], (3, 13, 32), dtype=jnp.float32)
    out = jax.block_until_ready(max_mean_cat_agg(tok, tn=8))
    _check(out, max_mean_cat_reference(tok), 1e-5, 1e-5)

    # 4) Batch-blocked with a partial last batch block (B=10, TB=8).
    tok = jax.random.normal(keys[3], (10, 8, 32), dtype=jnp.float32)
    out = jax.block_until_ready(max_mean_cat_agg(tok, tb=8))
    _check(out, max_mean_cat_reference(tok), 1e-5, 1e-5)

    # 5) bf16 input, lane-folded (D=64 -> fold=2), ragged multi-tile N.
    tok = jax.random.normal(keys[4], (2, 80, 64), dtype=jnp.bfloat16)
    out = jax.block_until_ready(max_mean_cat_agg(tok, tn=16))
    _check(out, max_mean_cat_reference(tok), 2e-2, 2e-2)

    print("KERNEL_OK")
</pallas_src>

<mosaic_0001>
module attributes {stable_mosaic.version = 11 : i64} {
  func.func @_max_mean_cat_kernel(%arg0: i32, %arg1: i32, %arg2: memref<2x4x128xf32, #tpu.memory_space<vmem>>, %arg3: memref<2x64xf32, #tpu.memory_space<vmem>>, %arg4: memref<2x128xf32, #tpu.memory_space<vmem>>, %arg5: memref<2x128xf32, #tpu.memory_space<vmem>>) attributes {dimension_semantics = [#tpu.dimension_semantics<parallel>, #tpu.dimension_semantics<arbitrary>], iteration_bounds = array<i64: 1, 1>, scalar_prefetch = 0 : i64, scratch_operands = 2 : i64, tpu.core_type = #tpu.core_type<tc>, window_params = [{transform_indices = @transform_0, window_bounds = array<i64: 2, 4, 128>}, {transform_indices = @transform_1, window_bounds = array<i64: 2, 64>}]} {
    %c0_i32 = arith.constant 0 : i32
    %0 = arith.cmpi eq, %arg1, %c0_i32 : i32
    %1 = arith.extui %0 : i1 to i32
    %c0_i32_0 = arith.constant 0 : i32
    %2 = arith.cmpi ne, %1, %c0_i32_0 : i32
    scf.if %2 {
      %cst_14 = arith.constant 0.000000e+00 : f32
      %15 = vector.broadcast %cst_14 : f32 to vector<2x128xf32>
      %c0_15 = arith.constant 0 : index
      %c0_16 = arith.constant 0 : index
      %16 = vector.load %arg4[%c0_15, %c0_16] : memref<2x128xf32, #tpu.memory_space<vmem>>, vector<2x128xf32>
      tpu.vector_store %arg4[%c0_15, %c0_16], %15 {strides = array<i32>} : memref<2x128xf32, #tpu.memory_space<vmem>>, vector<2x128xf32>,
      %cst_17 = arith.constant 0xFF800000 : f32
      %17 = vector.broadcast %cst_17 : f32 to vector<2x128xf32>
      %c0_18 = arith.constant 0 : index
      %c0_19 = arith.constant 0 : index
      %18 = vector.load %arg5[%c0_18, %c0_19] : memref<2x128xf32, #tpu.memory_space<vmem>>, vector<2x128xf32>
      tpu.vector_store %arg5[%c0_18, %c0_19], %17 {strides = array<i32>} : memref<2x128xf32, #tpu.memory_space<vmem>>, vector<2x128xf32>,
    } else {
    }
    %c0 = arith.constant 0 : index
    %c0_1 = arith.constant 0 : index
    %c0_2 = arith.constant 0 : index
    %3 = vector.load %arg2[%c0, %c0_1, %c0_2] : memref<2x4x128xf32, #tpu.memory_space<vmem>>, vector<2x4x128xf32>
    %c0_3 = arith.constant 0 : index
    %c0_4 = arith.constant 0 : index
    %4 = vector.load %arg4[%c0_3, %c0_4] : memref<2x128xf32, #tpu.memory_space<vmem>>, vector<2x128xf32>
    %cst = arith.constant dense<0.000000e+00> : vector<2x128xf32>
    %5 = vector.multi_reduction <add>, %3, %cst [1] : vector<2x4x128xf32> to vector<2x128xf32>
    %6 = arith.addf %4, %5 : vector<2x128xf32>
    %c0_5 = arith.constant 0 : index
    %c0_6 = arith.constant 0 : index
    %7 = vector.load %arg4[%c0_5, %c0_6] : memref<2x128xf32, #tpu.memory_space<vmem>>, vector<2x128xf32>
    tpu.vector_store %arg4[%c0_5, %c0_6], %6 {strides = array<i32>} : memref<2x128xf32, #tpu.memory_space<vmem>>, vector<2x128xf32>,
    %c0_7 = arith.constant 0 : index
    %c0_8 = arith.constant 0 : index
    %8 = vector.load %arg5[%c0_7, %c0_8] : memref<2x128xf32, #tpu.memory_space<vmem>>, vector<2x128xf32>
    %cst_9 = arith.constant dense<0xFF800000> : vector<2x128xf32>
    %9 = vector.multi_reduction <maximumf>, %3, %cst_9 [1] : vector<2x4x128xf32> to vector<2x128xf32>
    %10 = arith.maximumf %8, %9 : vector<2x128xf32>
    %c0_10 = arith.constant 0 : index
    %c0_11 = arith.constant 0 : index
    %11 = vector.load %arg5[%c0_10, %c0_11] : memref<2x128xf32, #tpu.memory_space<vmem>>, vector<2x128xf32>
    tpu.vector_store %arg5[%c0_10, %c0_11], %10 {strides = array<i32>} : memref<2x128xf32, #tpu.memory_space<vmem>>, vector<2x128xf32>,
    %c0_i32_12 = arith.constant 0 : i32
    %12 = arith.cmpi eq, %arg1, %c0_i32_12 : i32
    %13 = arith.extui %12 : i1 to i32
    %c0_i32_13 = arith.constant 0 : i32
    %14 = arith.cmpi ne, %13, %c0_i32_13 : i32
    scf.if %14 {
      %c0_14 = arith.constant 0 : index
      %c0_15 = arith.constant 0 : index
      %15 = vector.load %arg4[%c0_14, %c0_15] : memref<2x128xf32, #tpu.memory_space<vmem>>, vector<2x128xf32>
      %c0_16 = arith.constant 0 : index
      %c0_17 = arith.constant 0 : index
      %16 = vector.load %arg5[%c0_16, %c0_17] : memref<2x128xf32, #tpu.memory_space<vmem>>, vector<2x128xf32>
      %17 = vector.extract_strided_slice %15 {offsets = [0, 0], sizes = [2, 32], strides = [1, 1]} : vector<2x128xf32> to vector<2x32xf32>
      %18 = vector.extract_strided_slice %16 {offsets = [0, 0], sizes = [2, 32], strides = [1, 1]} : vector<2x128xf32> to vector<2x32xf32>
      %19 = vector.extract_strided_slice %15 {offsets = [0, 32], sizes = [2, 32], strides = [1, 1]} : vector<2x128xf32> to vector<2x32xf32>
      %20 = arith.addf %17, %19 : vector<2x32xf32>
      %21 = vector.extract_strided_slice %16 {offsets = [0, 32], sizes = [2, 32], strides = [1, 1]} : vector<2x128xf32> to vector<2x32xf32>
      %22 = arith.maximumf %18, %21 : vector<2x32xf32>
      %23 = vector.extract_strided_slice %15 {offsets = [0, 64], sizes = [2, 32], strides = [1, 1]} : vector<2x128xf32> to vector<2x32xf32>
      %24 = arith.addf %20, %23 : vector<2x32xf32>
      %25 = vector.extract_strided_slice %16 {offsets = [0, 64], sizes = [2, 32], strides = [1, 1]} : vector<2x128xf32> to vector<2x32xf32>
      %26 = arith.maximumf %22, %25 : vector<2x32xf32>
      %27 = vector.extract_strided_slice %15 {offsets = [0, 96], sizes = [2, 32], strides = [1, 1]} : vector<2x128xf32> to vector<2x32xf32>
      %28 = arith.addf %24, %27 : vector<2x32xf32>
      %29 = vector.extract_strided_slice %16 {offsets = [0, 96], sizes = [2, 32], strides = [1, 1]} : vector<2x128xf32> to vector<2x32xf32>
      %30 = arith.maximumf %26, %29 : vector<2x32xf32>
      %cst_18 = arith.constant 6.250000e-02 : f32
      %31 = vector.broadcast %cst_18 : f32 to vector<2x32xf32>
      %32 = arith.mulf %28, %31 : vector<2x32xf32>
      %33 = tpu.concatenate %32, %30 in 1 : vector<2x32xf32>, vector<2x32xf32> -> vector<2x64xf32>
      %c0_19 = arith.constant 0 : index
      %c0_20 = arith.constant 0 : index
      %34 = vector.load %arg3[%c0_19, %c0_20] : memref<2x64xf32, #tpu.memory_space<vmem>>, vector<2x64xf32>
      tpu.vector_store %arg3[%c0_19, %c0_20], %33 {strides = array<i32>} : memref<2x64xf32, #tpu.memory_space<vmem>>, vector<2x64xf32>,
    } else {
    }
    return
  }
  func.func @transform_0(%arg0: i32, %arg1: i32) -> (i32, i32, i32) {
    %c0_i32 = arith.constant 0 : i32
    %c0_i32_0 = arith.constant 0 : i32
    return %arg0, %arg1, %c0_i32 : i32, i32, i32
  }
  func.func @transform_1(%arg0: i32, %arg1: i32) -> (i32, i32) {
    %c0_i32 = arith.constant 0 : i32
    %c0_i32_0 = arith.constant 0 : i32
    return %arg0, %c0_i32 : i32, i32
  }
}

</mosaic_0001>

<llo_original>
// kernel: tpu_custom_call.1
$region0: #{tpu_custom_call.1}
  #allocation0 [shape = 'u32[]', space=smem, size = 0x4, offset = 0x4, fixed_abs, tag = 'smem constant byte address 0x4 - core index']
  #allocation1 [shape = 'u32[72,128]{1,0:T(1,128)}', space=vmem, size = 0x9000, scoped, tag = 'internal scratch']
  #allocation2 [shape = 'f32[2,128]{1,0:T(2,128)}', space=vmem, size = 0x400, scoped, tag = 'scratch operand']
  #allocation3 [shape = 'f32[2,128]{1,0:T(2,128)}', space=vmem, size = 0x400, scoped, tag = 'scratch operand']
  %s0 = inlined_call_operand.hbm [shape: f32[2,4,128], index: 0, kind: input, shape index: {}]
  %s1 = inlined_call_operand.hbm [shape: f32[2,64], index: 1, kind: output, shape index: {}]
  %s2 = sld [smem:[#allocation0]]
  $region26: #{tpu_custom_call.1} parent=0
    _
  %s4 = ssub.s32 1, %s2
  %s5 = scalar_select 0, %s4, %s2
  $region1: #{tpu_custom_call.1} parent=0
    #allocation4 [shape = 'u8[4096]{0}', space=vmem, size = 0x1000, scoped, tag = 'input window, operand 0, single buffered']
    #allocation5 [shape = 's32[1]{0}', space=sflag, size = 0x4, scoped, tag = 'scoped memory for tpu_custom_call.1']
    #allocation6 [shape = 's32[1]{0}', space=sflag, size = 0x4, scoped, tag = 'scoped memory for tpu_custom_call.1']
    #allocation7 [shape = 'u8[1024]{0}', space=vmem, size = 0x400, scoped, tag = 'output window, operand 0, single buffered']
    %6 = vsyncpa [#allocation5], 0
    %7 = vsyncpa [#allocation6], 0
    // Predicated region
    $region2: #{tpu_custom_call.1} parent=1 // pred_check
      _
    $region3: #{tpu_custom_call.1} parent=1 // pred_check_branch
      %9 = sbr.rel (0) target = $region5
    $region4: #{tpu_custom_call.1} parent=1 // pred_region
      %11 = vsyncadd [#allocation5], 0
      %s12 = sshll.u32 %s0, 4
      %s13 = int_to_ptr.hbm [resolvable:$true] %s12
      %s14 = sshll.u32 [#allocation4], 4
      %s15 = int_to_ptr.vmem [resolvable:$true] %s14
      %20 = dma.hbm_to_vmem [thread:$0]  %s13, 128, %s15, [#allocation5], 64, 64, 4
    $region5: #{tpu_custom_call.1} parent=1 // pred_fallthru
      _
    // Predicated region
    $region6: #{tpu_custom_call.1} parent=1 // pred_check
      _
    $region7: #{tpu_custom_call.1} parent=1 // pred_check_branch
      %22 = sbr.rel (0) target = $region9
    $region8: #{tpu_custom_call.1} parent=1 // pred_region
      %24 = dma.done [#allocation5], 128
    $region9: #{tpu_custom_call.1} parent=1 // pred_fallthru
      _
    %p25 = scmp.eq.s32.totalorder 0, 0
    // Predicated region
    $region10: #{tpu_custom_call.1} parent=1 // pred_check
      %p26 = pneg %p25
    $region11: #{tpu_custom_call.1} parent=1 // pred_check_branch
      %28 = sbr.rel (%p26) target = $region13
    $region12: #{tpu_custom_call.1} parent=1 // pred_region
      %29 = vst [vmem:[#allocation2] sm:$0x3] 0.0
      %30 = vst [vmem:[#allocation3] sm:$0x3] -inf
    $region13: #{tpu_custom_call.1} parent=1 // pred_fallthru
      _
    %v31 = vld [vmem:[#allocation4] sm:$0xf]
    %v32 = vld [vmem:[#allocation4 + $0x4] sm:$0xf]
    %v33 = vld [vmem:[#allocation2] sm:$0x3]
    %vm34 = vcmask 1043456
    %v35 = vsel %vm34, %v31, 0.0
    %v36 = vrot.slane %v35, 4
    %v37 = vadd.f32 %v35, %v36
    %v38 = vrot.slane %v37, 2
    %v39 = vadd.f32 %v37, %v38
    %v40 = vrot.slane %v39, 1
    %v41 = vadd.f32 %v39, %v40
    %v42 = vsel %vm34, %v32, 0.0
    %v43 = vrot.slane %v42, 4
    %v44 = vadd.f32 %v42, %v43
    %v45 = vrot.slane %v44, 2
    %v46 = vadd.f32 %v44, %v45
    %v47 = vrot.slane %v46, 1
    %v48 = vadd.f32 %v46, %v47
    %vm51 = vcmask 1041409
    %v52 = vsel %vm51, %v48, %v41
    %v54 = vadd.f32 %v33, %v52
    %55 = vst [vmem:[#allocation2] sm:$0x3] %v54
    %v56 = vld [vmem:[#allocation3] sm:$0x3]
    %v57 = vsel %vm34, %v31, -inf
    %v58 = vrot.slane %v57, 4
    %v59 = vmax.f32 %v57, %v58
    %v60 = vrot.slane %v59, 2
    %v61 = vmax.f32 %v59, %v60
    %v62 = vrot.slane %v61, 1
    %v63 = vmax.f32 %v61, %v62
    %v64 = vsel %vm34, %v32, -inf
    %v65 = vrot.slane %v64, 4
    %v66 = vmax.f32 %v64, %v65
    %v67 = vrot.slane %v66, 2
    %v68 = vmax.f32 %v66, %v67
    %v69 = vrot.slane %v68, 1
    %v70 = vmax.f32 %v68, %v69
    %v73 = vsel %vm51, %v70, %v63
    %v75 = vmax.f32 %v56, %v73
    %76 = vst [vmem:[#allocation3] sm:$0x3] %v75
    // Predicated region
    $region14: #{tpu_custom_call.1} parent=1 // pred_check
      %p77 = pneg %p25
    $region15: #{tpu_custom_call.1} parent=1 // pred_check_branch
      %79 = sbr.rel (%p77) target = $region17
    $region16: #{tpu_custom_call.1} parent=1 // pred_region
      %v80 = vld [vmem:[#allocation2] sm:$0x3]
      %v81 = vld [vmem:[#allocation3] sm:$0x3]
      %83 = vrot.lane.b32.xlu0 %v80, 96
      %v84 = vpop.permute.xlu0 %83
      %v86 = vadd.f32 %v80, %v84
      %88 = vrot.lane.b32.xlu0 %v81, 96
      %v89 = vpop.permute.xlu0 %88
      %v91 = vmax.f32 %v81, %v89
      %92 = vrot.lane.b32.xlu0 %v80, 64
      %v93 = vpop.permute.xlu0 %92
      %v95 = vadd.f32 %v86, %v93
      %96 = vrot.lane.b32.xlu0 %v81, 64
      %v97 = vpop.permute.xlu0 %96
      %v99 = vmax.f32 %v91, %v97
      %100 = vrot.lane.b32.xlu0 %v80, 32
      %v101 = vpop.permute.xlu0 %100
      %v103 = vadd.f32 %v95, %v101
      %104 = vrot.lane.b32.xlu0 %v81, 32
      %v105 = vpop.permute.xlu0 %104
      %v107 = vmax.f32 %v99, %v105
      %v108 = vmul.f32 %v103, 0.0625
      %110 = vrot.lane.b32.xlu0 %v107, 32
      %v111 = vpop.permute.xlu0 %110
      %vm113 = vcmask 261120
      %v114 = vsel %vm113, %v108, %v111
      %vm115 = vcmask 517120
      %116 = vst.msk [vmem:[#allocation7] sm:$0x3] %vm115, %v114
    $region17: #{tpu_custom_call.1} parent=1 // pred_fallthru
      _
    // Predicated region
    $region18: #{tpu_custom_call.1} parent=1 // pred_check
      _
    $region19: #{tpu_custom_call.1} parent=1 // pred_check_branch
      %118 = sbr.rel (0) target = $region21
    $region20: #{tpu_custom_call.1} parent=1 // pred_region
      %120 = vsyncadd [#allocation6], 0
      %s122 = sshll.u32 [#allocation7], 4
      %s123 = int_to_ptr.vmem [resolvable:$true] %s122
      %s124 = sshll.u32 %s1, 4
      %s125 = int_to_ptr.hbm [resolvable:$true] %s124
      %127 = dma.vmem_to_hbm [thread:$0]  %s123, 32, %s125, [#allocation6]
    $region21: #{tpu_custom_call.1} parent=1 // pred_fallthru
      _
    // Predicated region
    $region22: #{tpu_custom_call.1} parent=1 // pred_check
      _
    $region23: #{tpu_custom_call.1} parent=1 // pred_check_branch
      %129 = sbr.rel (0) target = $region25
    $region24: #{tpu_custom_call.1} parent=1 // pred_region
      %131 = dma.done [#allocation6], 32
    $region25: #{tpu_custom_call.1} parent=1 // pred_fallthru
      _
    %132 = vsyncpa [#allocation5], 1
    %133 = vsyncpa [#allocation6], 1

</llo_original>
